<compile_context>
chip_gen: v5e
topology: v5e:2x2
jax: 0.10.0
libtpu: 0.0.40
codegen_flags: <defaults>
</compile_context>

<pallas_src>
import functools

import jax
import jax.numpy as jnp
from jax.experimental import pallas as pl
from jax.experimental.pallas import tpu as pltpu


def _round_up(n, m):
    return (n + m - 1) // m * m


def _block_kernel(x_ref, w2_ref, b2_ref, w1_ref, b1_ref, o_ref, *, seg_len, valid_len):
    """One grid step over a (Cp, Bt*seg_len) lane-folded activation slab.

    seg_len   : padded per-batch length (lane segment period)
    valid_len : real L (Conv1d zero-padding boundary inside each segment)
    """
    xt = x_ref[...]                                   # (Cp, T), input dtype
    cp, t = xt.shape
    dot_dtype = xt.dtype

    # Segment-local lane position (period = one folded batch element).
    pos = jax.lax.broadcasted_iota(jnp.int32, (cp, t), 1) % seg_len
    has_left = pos != 0                               # left neighbour is in-segment
    has_right = pos != (valid_len - 1)                # right neighbour is real data

    def stack_taps(v):
        # [v[l-1]; v[l]; v[l+1]] stacked along channels -> (3*Cp, T).
        # Shifts are XLU rolls; boundary columns are masked to reproduce the
        # conv's zero padding and to kill roll wrap-around / cross-batch reads.
        prev = pltpu.roll(v, shift=1, axis=1)
        nxt = pltpu.roll(v, shift=t - 1, axis=1)
        prev = jnp.where(has_left, prev, jnp.zeros_like(prev))
        nxt = jnp.where(has_right, nxt, jnp.zeros_like(nxt))
        return jnp.concatenate([prev, v, nxt], axis=0)

    # conv2 (BN2 scale folded into w2) -> + shift -> ReLU     (single K=3*Cp matmul)
    h = jnp.dot(w2_ref[...], stack_taps(xt), preferred_element_type=jnp.float32)
    h = jnp.maximum(h + b2_ref[...], 0.0)

    # conv1 (BN1 scale folded into w1) -> + shift
    h = jnp.dot(w1_ref[...], stack_taps(h.astype(dot_dtype)),
                preferred_element_type=jnp.float32)
    h = h + b1_ref[...]

    # identity shortcut (stride=1) + ReLU
    h = h + xt.astype(jnp.float32)
    o_ref[...] = jnp.maximum(h, 0.0).astype(o_ref.dtype)


def basic_block_dec_1d(x, w2, bn2, w1, bn1, eps=1e-5):
    """BasicBlockDec1D forward (stride=1, inference BN).

    x: (B, C, L).  w1/w2: (C, C, 3).  bn*: (gamma, beta, running_mean, running_var).
    """
    B, C, L = x.shape
    dt = x.dtype
    cp = _round_up(C, 8)                   # sublane-pad channels
    seg = _round_up(L, 128)                # lane-pad each batch element's length

    def fold(bn):
        gamma, beta, mean, var = (jnp.asarray(a, jnp.float32) for a in bn)
        scale = gamma / jnp.sqrt(var + eps)
        shift = beta - mean * scale
        return scale, shift

    s2, sh2 = fold(bn2)
    s1, sh1 = fold(bn1)

    # Fold BN scale into the conv weights and fuse the 3 taps along K:
    # W[:, k*Cp:(k+1)*Cp] == scale[:, None] * w[:, :, k]   (k = 0: x[l-1], 1: x[l], 2: x[l+1])
    def fuse(w, scale):
        wf = scale[:, None, None] * jnp.asarray(w, jnp.float32)        # (C, C, 3)
        wf = jnp.pad(wf, ((0, cp - C), (0, cp - C), (0, 0)))           # (Cp, Cp, 3)
        return jnp.transpose(wf, (0, 2, 1)).reshape(cp, 3 * cp).astype(dt)

    W2 = fuse(w2, s2)
    W1 = fuse(w1, s1)
    b2 = jnp.pad(sh2, (0, cp - C)).reshape(cp, 1)
    b1 = jnp.pad(sh1, (0, cp - C)).reshape(cp, 1)

    # Lane-fold the batch: (B, C, L) -> (Cp, B*seg).  Zero lane padding between
    # segments doubles as the conv's 'same' zero padding.
    xp = jnp.pad(x, ((0, 0), (0, cp - C), (0, seg - L)))               # (B, Cp, seg)
    x2d = jnp.transpose(xp, (1, 0, 2)).reshape(cp, B * seg)

    # Several batch segments per grid step: amortizes per-step overhead while the
    # double-buffered in+out blocks stay comfortably inside VMEM on v5e/v6e/v7x.
    max_block_lanes = 4096
    bt = max(1, min(B, max_block_lanes // seg))
    t_blk = bt * seg
    grid = (pl.cdiv(B, bt),)

    kernel = functools.partial(_block_kernel, seg_len=seg, valid_len=L)

    out2d = pl.pallas_call(
        kernel,
        out_shape=jax.ShapeDtypeStruct((cp, B * seg), dt),
        grid_spec=pltpu.PrefetchScalarGridSpec(
            num_scalar_prefetch=0,
            grid=grid,
            in_specs=[
                pl.BlockSpec((cp, t_blk), lambda i: (0, i)),           # activations
                pl.BlockSpec((cp, 3 * cp), lambda i: (0, 0)),          # fused conv2 weight
                pl.BlockSpec((cp, 1), lambda i: (0, 0)),               # bn2 shift
                pl.BlockSpec((cp, 3 * cp), lambda i: (0, 0)),          # fused conv1 weight
                pl.BlockSpec((cp, 1), lambda i: (0, 0)),               # bn1 shift
            ],
            out_specs=pl.BlockSpec((cp, t_blk), lambda i: (0, i)),
        ),
        compiler_params=pltpu.CompilerParams(
            dimension_semantics=("parallel",),
            vmem_limit_bytes=32 * 1024 * 1024,
        ),
    )(x2d, W2, b2, W1, b1)

    # Undo lane folding / padding.
    out = out2d.reshape(cp, B, seg).transpose(1, 0, 2)[:, :C, :L]
    return out.astype(dt)


# ------------------------- pure-JAX reference -------------------------
def _ref_conv3(x, w):
    # x: (B, C, L), w: (Cout, Cin, 3)
    xpad = jnp.pad(x, ((0, 0), (0, 0), (1, 1)))
    return (jnp.einsum("oc,bcl->bol", w[:, :, 0], xpad[:, :, :-2])
            + jnp.einsum("oc,bcl->bol", w[:, :, 1], xpad[:, :, 1:-1])
            + jnp.einsum("oc,bcl->bol", w[:, :, 2], xpad[:, :, 2:]))


def _ref_bn(x, bn, eps=1e-5):
    gamma, beta, mean, var = bn
    scale = (gamma / jnp.sqrt(var + eps)).reshape(1, -1, 1)
    shift = (beta - mean * gamma / jnp.sqrt(var + eps)).reshape(1, -1, 1)
    return x * scale + shift


def _ref_forward(x, w2, bn2, w1, bn1):
    h = jnp.maximum(_ref_bn(_ref_conv3(x, w2), bn2), 0.0)
    h = _ref_bn(_ref_conv3(h, w1), bn1)
    h = h + x                      # identity shortcut (stride=1)
    return jnp.maximum(h, 0.0)


if __name__ == "__main__":
    B, C, L = 2, 4, 16             # in_planes=4, stride=1 -> planes=4
    key = jax.random.PRNGKey(0)
    ks = jax.random.split(key, 10)

    x = jax.random.normal(ks[0], (B, C, L), dtype=jnp.float32)
    w2 = 0.1 * jax.random.normal(ks[1], (C, C, 3), dtype=jnp.float32)
    w1 = 0.1 * jax.random.normal(ks[2], (C, C, 3), dtype=jnp.float32)

    bn2 = (jax.random.uniform(ks[3], (C,), minval=0.5, maxval=1.5),
           0.1 * jax.random.normal(ks[4], (C,)),
           0.1 * jax.random.normal(ks[5], (C,)),
           jax.random.uniform(ks[6], (C,), minval=0.5, maxval=1.5))
    bn1 = (jax.random.uniform(ks[7], (C,), minval=0.5, maxval=1.5),
           0.1 * jax.random.normal(ks[8], (C,)),
           0.1 * jax.random.normal(ks[9], (C,)),
           jnp.ones((C,), jnp.float32))

    out = basic_block_dec_1d(x, w2, bn2, w1, bn1)
    out = jax.block_until_ready(out)

    ref = _ref_forward(x, w2, bn2, w1, bn1)
    assert out.shape == (B, C, L)
    assert jnp.allclose(out, ref, atol=1e-5, rtol=1e-5), "mismatch vs reference"
    print("KERNEL_OK")
</pallas_src>

<mosaic_0001>
module attributes {stable_mosaic.version = 11 : i64} {
  func.func @_block_kernel(%arg0: i32, %arg1: memref<8x256xf32, #tpu.memory_space<vmem>>, %arg2: memref<8x24xf32, #tpu.memory_space<vmem>>, %arg3: memref<8x1xf32, #tpu.memory_space<vmem>>, %arg4: memref<8x24xf32, #tpu.memory_space<vmem>>, %arg5: memref<8x1xf32, #tpu.memory_space<vmem>>, %arg6: memref<8x256xf32, #tpu.memory_space<vmem>>) attributes {dimension_semantics = [#tpu.dimension_semantics<parallel>], iteration_bounds = array<i64: 1>, scalar_prefetch = 0 : i64, scratch_operands = 0 : i64, tpu.core_type = #tpu.core_type<tc>, window_params = [{transform_indices = @transform_0, window_bounds = array<i64: 8, 256>}, {pipeline_mode = #tpu.pipeline_mode<synchronous>, transform_indices = @transform_1, window_bounds = array<i64: 8, 24>}, {pipeline_mode = #tpu.pipeline_mode<synchronous>, transform_indices = @transform_2, window_bounds = array<i64: 8, 1>}, {pipeline_mode = #tpu.pipeline_mode<synchronous>, transform_indices = @transform_3, window_bounds = array<i64: 8, 24>}, {pipeline_mode = #tpu.pipeline_mode<synchronous>, transform_indices = @transform_4, window_bounds = array<i64: 8, 1>}, {transform_indices = @transform_5, window_bounds = array<i64: 8, 256>}]} {
    %c0 = arith.constant 0 : index
    %c0_0 = arith.constant 0 : index
    %0 = vector.load %arg1[%c0, %c0_0] : memref<8x256xf32, #tpu.memory_space<vmem>>, vector<8x256xf32>
    %1 = tpu.iota {dimensions = array<i32: 1>} : vector<8x256xi32>
    %c128_i32 = arith.constant 128 : i32
    %c0_i32 = arith.constant 0 : i32
    %2 = arith.cmpi eq, %c128_i32, %c0_i32 : i32
    %c1_i32 = arith.constant 1 : i32
    %3 = arith.select %2, %c1_i32, %c128_i32 : i32
    %4 = vector.broadcast %3 : i32 to vector<8x256xi32>
    %5 = arith.remsi %1, %4 : vector<8x256xi32>
    %c0_i32_1 = arith.constant 0 : i32
    %6 = vector.broadcast %c0_i32_1 : i32 to vector<8x256xi32>
    %7 = arith.cmpi ne, %5, %6 : vector<8x256xi32>
    %c0_i32_2 = arith.constant 0 : i32
    %8 = vector.broadcast %c0_i32_2 : i32 to vector<8x256xi32>
    %9 = arith.cmpi slt, %5, %8 : vector<8x256xi32>
    %c0_i32_3 = arith.constant 0 : i32
    %10 = arith.cmpi slt, %3, %c0_i32_3 : i32
    %11 = vector.broadcast %10 : i1 to vector<8x256xi1>
    %12 = vector.broadcast %11 : vector<8x256xi1> to vector<8x256xi1>
    %13 = arith.xori %9, %12 : vector<8x256xi1>
    %14 = arith.andi %13, %7 : vector<8x256xi1>
    %15 = vector.broadcast %3 : i32 to vector<8x256xi32>
    %16 = arith.addi %5, %15 : vector<8x256xi32>
    %17 = arith.select %14, %16, %5 : vector<8x256xi1>, vector<8x256xi32>
    %c0_i32_4 = arith.constant 0 : i32
    %18 = vector.broadcast %c0_i32_4 : i32 to vector<8x256xi32>
    %19 = arith.cmpi ne, %17, %18 : vector<8x256xi32>
    %c15_i32 = arith.constant 15 : i32
    %20 = vector.broadcast %c15_i32 : i32 to vector<8x256xi32>
    %21 = arith.cmpi ne, %17, %20 : vector<8x256xi32>
    %c0_5 = arith.constant 0 : index
    %c0_6 = arith.constant 0 : index
    %22 = vector.load %arg2[%c0_5, %c0_6] : memref<8x24xf32, #tpu.memory_space<vmem>>, vector<8x24xf32>
    %c1_i32_7 = arith.constant 1 : i32
    %23 = tpu.dynamic_rotate %0 by %c1_i32_7 dim 1 : vector<8x256xf32>, i32 -> vector<8x256xf32>
    %c255_i32 = arith.constant 255 : i32
    %24 = tpu.dynamic_rotate %0 by %c255_i32 dim 1 : vector<8x256xf32>, i32 -> vector<8x256xf32>
    %cst = arith.constant 0.000000e+00 : f32
    %25 = vector.broadcast %cst : f32 to vector<8x256xf32>
    %26 = arith.select %19, %23, %25 : vector<8x256xi1>, vector<8x256xf32>
    %cst_8 = arith.constant 0.000000e+00 : f32
    %27 = vector.broadcast %cst_8 : f32 to vector<8x256xf32>
    %28 = arith.select %21, %24, %27 : vector<8x256xi1>, vector<8x256xf32>
    %29 = tpu.concatenate %26, %0, %28 in 0 : vector<8x256xf32>, vector<8x256xf32>, vector<8x256xf32> -> vector<24x256xf32>
    %cst_9 = arith.constant dense<0.000000e+00> : vector<8x256xf32>
    %30 = tpu.matmul %22, %29, %cst_9 {dimension_numbers = #tpu.dot_dimension_numbers<[1], [0], [0], [1], [0, 0, 1, 1], [], []>} : vector<8x24xf32>, vector<24x256xf32>, vector<8x256xf32> -> vector<8x256xf32>
    %c0_10 = arith.constant 0 : index
    %c0_11 = arith.constant 0 : index
    %31 = vector.load %arg3[%c0_10, %c0_11] : memref<8x1xf32, #tpu.memory_space<vmem>>, vector<8x1xf32>
    %32 = vector.broadcast %31 : vector<8x1xf32> to vector<8x256xf32>
    %33 = arith.addf %30, %32 : vector<8x256xf32>
    %cst_12 = arith.constant 0.000000e+00 : f32
    %34 = vector.broadcast %cst_12 : f32 to vector<8x256xf32>
    %35 = arith.maximumf %33, %34 : vector<8x256xf32>
    %c0_13 = arith.constant 0 : index
    %c0_14 = arith.constant 0 : index
    %36 = vector.load %arg4[%c0_13, %c0_14] : memref<8x24xf32, #tpu.memory_space<vmem>>, vector<8x24xf32>
    %c1_i32_15 = arith.constant 1 : i32
    %37 = tpu.dynamic_rotate %35 by %c1_i32_15 dim 1 : vector<8x256xf32>, i32 -> vector<8x256xf32>
    %c255_i32_16 = arith.constant 255 : i32
    %38 = tpu.dynamic_rotate %35 by %c255_i32_16 dim 1 : vector<8x256xf32>, i32 -> vector<8x256xf32>
    %cst_17 = arith.constant 0.000000e+00 : f32
    %39 = vector.broadcast %cst_17 : f32 to vector<8x256xf32>
    %40 = arith.select %19, %37, %39 : vector<8x256xi1>, vector<8x256xf32>
    %cst_18 = arith.constant 0.000000e+00 : f32
    %41 = vector.broadcast %cst_18 : f32 to vector<8x256xf32>
    %42 = arith.select %21, %38, %41 : vector<8x256xi1>, vector<8x256xf32>
    %43 = tpu.concatenate %40, %35, %42 in 0 : vector<8x256xf32>, vector<8x256xf32>, vector<8x256xf32> -> vector<24x256xf32>
    %cst_19 = arith.constant dense<0.000000e+00> : vector<8x256xf32>
    %44 = tpu.matmul %36, %43, %cst_19 {dimension_numbers = #tpu.dot_dimension_numbers<[1], [0], [0], [1], [0, 0, 1, 1], [], []>} : vector<8x24xf32>, vector<24x256xf32>, vector<8x256xf32> -> vector<8x256xf32>
    %c0_20 = arith.constant 0 : index
    %c0_21 = arith.constant 0 : index
    %45 = vector.load %arg5[%c0_20, %c0_21] : memref<8x1xf32, #tpu.memory_space<vmem>>, vector<8x1xf32>
    %46 = vector.broadcast %45 : vector<8x1xf32> to vector<8x256xf32>
    %47 = arith.addf %44, %46 : vector<8x256xf32>
    %48 = arith.addf %47, %0 : vector<8x256xf32>
    %cst_22 = arith.constant 0.000000e+00 : f32
    %49 = vector.broadcast %cst_22 : f32 to vector<8x256xf32>
    %50 = arith.maximumf %48, %49 : vector<8x256xf32>
    %c0_23 = arith.constant 0 : index
    %c0_24 = arith.constant 0 : index
    %51 = vector.load %arg6[%c0_23, %c0_24] : memref<8x256xf32, #tpu.memory_space<vmem>>, vector<8x256xf32>
    tpu.vector_store %arg6[%c0_23, %c0_24], %50 {strides = array<i32>} : memref<8x256xf32, #tpu.memory_space<vmem>>, vector<8x256xf32>,
    return
  }
  func.func @transform_0(%arg0: i32) -> (i32, i32) {
    %c0_i32 = arith.constant 0 : i32
    %c0_i32_0 = arith.constant 0 : i32
    return %c0_i32, %arg0 : i32, i32
  }
  func.func @transform_1(%arg0: i32) -> (i32, i32) {
    %c0_i32 = arith.constant 0 : i32
    %c0_i32_0 = arith.constant 0 : i32
    %c0_i32_1 = arith.constant 0 : i32
    return %c0_i32, %c0_i32_0 : i32, i32
  }
  func.func @transform_2(%arg0: i32) -> (i32, i32) {
    %c0_i32 = arith.constant 0 : i32
    %c0_i32_0 = arith.constant 0 : i32
    %c0_i32_1 = arith.constant 0 : i32
    return %c0_i32, %c0_i32_0 : i32, i32
  }
  func.func @transform_3(%arg0: i32) -> (i32, i32) {
    %c0_i32 = arith.constant 0 : i32
    %c0_i32_0 = arith.constant 0 : i32
    %c0_i32_1 = arith.constant 0 : i32
    return %c0_i32, %c0_i32_0 : i32, i32
  }
  func.func @transform_4(%arg0: i32) -> (i32, i32) {
    %c0_i32 = arith.constant 0 : i32
    %c0_i32_0 = arith.constant 0 : i32
    %c0_i32_1 = arith.constant 0 : i32
    return %c0_i32, %c0_i32_0 : i32, i32
  }
  func.func @transform_5(%arg0: i32) -> (i32, i32) {
    %c0_i32 = arith.constant 0 : i32
    %c0_i32_0 = arith.constant 0 : i32
    return %c0_i32, %arg0 : i32, i32
  }
}

</mosaic_0001>

<llo_original>
// kernel: tpu_custom_call.1
$region0: #{tpu_custom_call.1}
  #allocation0 [shape = 'u32[]', space=smem, size = 0x4, offset = 0x4, fixed_abs, tag = 'smem constant byte address 0x4 - core index']
  #allocation1 [shape = 'u32[72,128]{1,0:T(1,128)}', space=vmem, size = 0x9000, scoped, tag = 'internal scratch']
  %s0 = inlined_call_operand.vmem [shape: f32[8,256], index: 0, kind: input, shape index: {}]
  %s1 = inlined_call_operand.hbm [shape: f32[8,24], index: 1, kind: input, shape index: {}]
  %s2 = inlined_call_operand.vmem [shape: f32[8,1], index: 2, kind: input, shape index: {}]
  %s3 = inlined_call_operand.hbm [shape: f32[8,24], index: 3, kind: input, shape index: {}]
  %s4 = inlined_call_operand.vmem [shape: f32[8,1], index: 4, kind: input, shape index: {}]
  %s5 = inlined_call_operand.hbm [shape: f32[8,256], index: 5, kind: output, shape index: {}]
  %s6 = sld [smem:[#allocation0]]
  $region38: #{tpu_custom_call.1} parent=0
    _
  %s8 = ssub.s32 1, %s6
  %s9 = scalar_select 0, %s8, %s6
  $region1: #{tpu_custom_call.1} parent=0
    #allocation2 [shape = 'u8[4096]{0}', space=vmem, size = 0x1000, scoped, tag = 'input window, operand 1, single buffered']
    #allocation3 [shape = 's32[1]{0}', space=sflag, size = 0x4, scoped, tag = 'scoped memory for tpu_custom_call.1']
    #allocation4 [shape = 's32[1]{0}', space=sflag, size = 0x4, scoped, tag = 'scoped memory for tpu_custom_call.1']
    #allocation5 [shape = 'u8[4096]{0}', space=vmem, size = 0x1000, scoped, tag = 'input window, operand 3, single buffered']
    #allocation6 [shape = 's32[1]{0}', space=sflag, size = 0x4, scoped, tag = 'scoped memory for tpu_custom_call.1']
    #allocation7 [shape = 'u8[8192]{0}', space=vmem, size = 0x2000, scoped, tag = 'output window, operand 0, single buffered']
    %10 = vsyncpa [#allocation3], 0
    %11 = vsyncpa [#allocation6], 0
    %12 = vsyncpa [#allocation4], 0
    // Predicated region
    $region2: #{tpu_custom_call.1} parent=1 // pred_check
      _
    $region3: #{tpu_custom_call.1} parent=1 // pred_check_branch
      %14 = sbr.rel (0) target = $region5
    $region4: #{tpu_custom_call.1} parent=1 // pred_region
      _
    $region5: #{tpu_custom_call.1} parent=1 // pred_fallthru
      _
    // Predicated region
    $region6: #{tpu_custom_call.1} parent=1 // pred_check
      _
    $region7: #{tpu_custom_call.1} parent=1 // pred_check_branch
      %16 = sbr.rel (0) target = $region9
    $region8: #{tpu_custom_call.1} parent=1 // pred_region
      %18 = vsyncadd [#allocation3], 0
      %s20 = sshll.u32 %s1, 4
      %s21 = int_to_ptr.hbm [resolvable:$true] %s20
      %s22 = sshll.u32 [#allocation2], 4
      %s23 = int_to_ptr.vmem [resolvable:$true] %s22
      %25 = dma.hbm_to_vmem [thread:$0]  %s21, 128, %s23, [#allocation3]
    $region9: #{tpu_custom_call.1} parent=1 // pred_fallthru
      _
    // Predicated region
    $region10: #{tpu_custom_call.1} parent=1 // pred_check
      _
    $region11: #{tpu_custom_call.1} parent=1 // pred_check_branch
      %27 = sbr.rel (0) target = $region13
    $region12: #{tpu_custom_call.1} parent=1 // pred_region
      _
    $region13: #{tpu_custom_call.1} parent=1 // pred_fallthru
      _
    // Predicated region
    $region14: #{tpu_custom_call.1} parent=1 // pred_check
      _
    $region15: #{tpu_custom_call.1} parent=1 // pred_check_branch
      %29 = sbr.rel (0) target = $region17
    $region16: #{tpu_custom_call.1} parent=1 // pred_region
      %31 = vsyncadd [#allocation6], 0
      %s33 = sshll.u32 %s3, 4
      %s34 = int_to_ptr.hbm [resolvable:$true] %s33
      %s35 = sshll.u32 [#allocation5], 4
      %s36 = int_to_ptr.vmem [resolvable:$true] %s35
      %38 = dma.hbm_to_vmem [thread:$0]  %s34, 128, %s36, [#allocation6]
    $region17: #{tpu_custom_call.1} parent=1 // pred_fallthru
      _
    // Predicated region
    $region18: #{tpu_custom_call.1} parent=1 // pred_check
      _
    $region19: #{tpu_custom_call.1} parent=1 // pred_check_branch
      %40 = sbr.rel (0) target = $region21
    $region20: #{tpu_custom_call.1} parent=1 // pred_region
      _
    $region21: #{tpu_custom_call.1} parent=1 // pred_fallthru
      _
    // Predicated region
    $region22: #{tpu_custom_call.1} parent=1 // pred_check
      _
    $region23: #{tpu_custom_call.1} parent=1 // pred_check_branch
      %42 = sbr.rel (0) target = $region25
    $region24: #{tpu_custom_call.1} parent=1 // pred_region
      %44 = dma.done [#allocation3], 128
    $region25: #{tpu_custom_call.1} parent=1 // pred_fallthru
      _
    // Predicated region
    $region26: #{tpu_custom_call.1} parent=1 // pred_check
      _
    $region27: #{tpu_custom_call.1} parent=1 // pred_check_branch
      %46 = sbr.rel (0) target = $region29
    $region28: #{tpu_custom_call.1} parent=1 // pred_region
      %48 = dma.done [#allocation6], 128
    $region29: #{tpu_custom_call.1} parent=1 // pred_fallthru
      _
    %v49 = vld [vmem:[%s0] sm:$0xff]
    %v50 = vld [vmem:[%s0 + $0x8] sm:$0xff]
    %v51 = vlaneseq
    %v52 = vand.u32 %v51, 127
    %v53 = vadd.s32 %v52, 128
    %vm54 = vcmp.lt.s32.totalorder %v52, 0
    %v55 = vsub.s32 0, %v52
    %v56 = vsel %vm54, %v55, %v52
    %v57 = vshrl.u32 %v56, 7
    %v58 = vand.u32 %v56, 127
    %v59 = vsub.s32 0, %v58
    %v60 = vsel %vm54, %v59, %v58
    %vm61 = vcmp.lt.s32.totalorder %v53, 0
    %v62 = vsub.s32 0, %v53
    %v63 = vsel %vm61, %v62, %v53
    %v64 = vshrl.u32 %v63, 7
    %v65 = vand.u32 %v63, 127
    %v66 = vsub.s32 0, %v65
    %v67 = vsel %vm61, %v66, %v65
    %vm68 = vcmp.ne.s32.totalorder %v60, 0
    %vm69 = vcmp.ne.s32.totalorder %v67, 0
    %vm70 = vcmp.lt.s32.totalorder %v60, 0
    %vm71 = vcmp.lt.s32.totalorder %v67, 0
    %vm72 = vmand %vm70, %vm68
    %vm73 = vmand %vm71, %vm69
    %v74 = vadd.s32 %v60, 128
    %v75 = vadd.s32 %v67, 128
    %v76 = vsel %vm72, %v74, %v60
    %v77 = vsel %vm73, %v75, %v67
    %vm78 = vcmp.ne.s32.totalorder %v76, 0
    %vm79 = vcmp.ne.s32.totalorder %v77, 0
    %vm80 = vcmp.ne.s32.totalorder %v76, 15
    %vm81 = vcmp.ne.s32.totalorder %v77, 15
    %v82 = vld [vmem:[#allocation2] sm:$0xff]
    %83 = vrot.lane.b32.xlu0 %v49, 1
    %v84 = vpop.permute.xlu0 %83
    %85 = vrot.lane.b32.xlu0 %v50, 1
    %v86 = vpop.permute.xlu0 %85
    %vm87 = vcmp.lt.s32.totalorder %v52, 1
    %v88 = vsel %vm87, %v84, %v86
    %v89 = vsel %vm87, %v86, %v84
    %90 = vrot.lane.b32.xlu0 %v49, 127
    %v91 = vpop.permute.xlu0 %90
    %92 = vrot.lane.b32.xlu0 %v50, 127
    %v93 = vpop.permute.xlu0 %92
    %vm94 = vcmp.lt.s32.totalorder %v52, 127
    %v95 = vsel %vm94, %v91, %v93
    %v96 = vsel %vm94, %v93, %v91
    %v97 = vsel %vm78, %v89, 0.0
    %v98 = vsel %vm79, %v88, 0.0
    %v99 = vsel %vm80, %v95, 0.0
    %v100 = vsel %vm81, %v96, 0.0
    %v101 = vld [vmem:[%s2] sm:$0xff]
    %103 = vset.pattern.permute.xlu0 0
    %104 = vperm.xlu0 %103, %v101
    %v105 = vpop.permute.xlu0 %104
    %vm107 = vcmask 195584
    %v109 = vsel %vm107, %v82, 0
    %111 = vmatpush.msra.mxu0 0.0
    %112 = vmatpush.msra.mxu0 0.0
    %113 = vmatpush.msra.mxu0 0.0
    %114 = vmatpush.msra.mxu0 0.0
    %115 = vmatpush.msra.mxu0 0.0
    %116 = vmatpush.msra.mxu0 0.0
    %117 = vmatpush.msra.mxu0 0.0
    %118 = vmatpush.msra.mxu0 0.0
    %119 = vmatpush.msra.mxu0 0.0
    %120 = vmatpush.msra.mxu0 0.0
    %121 = vmatpush.msra.mxu0 0.0
    %122 = vmatpush.msra.mxu0 0.0
    %123 = vmatpush.msra.mxu0 0.0
    %124 = vmatpush.msra.mxu0 %v99
    %125 = vmatpush.msra.mxu0 %v49
    %126 = vmatpush.msra.mxu0 %v97
    %127 = vmatmul.f32.gmra.mxu0 %v109
    %v128 = vpop.f32.mrf.mxu0
    %v129 = vadd.f32 %v105, %v128
    %130 = vdwg.mxu0
    %131 = vmatpush.msra.mxu0 0.0
    %132 = vmatpush.msra.mxu0 0.0
    %133 = vmatpush.msra.mxu0 0.0
    %134 = vmatpush.msra.mxu0 0.0
    %135 = vmatpush.msra.mxu0 0.0
    %136 = vmatpush.msra.mxu0 0.0
    %137 = vmatpush.msra.mxu0 0.0
    %138 = vmatpush.msra.mxu0 0.0
    %139 = vmatpush.msra.mxu0 0.0
    %140 = vmatpush.msra.mxu0 0.0
    %141 = vmatpush.msra.mxu0 0.0
    %142 = vmatpush.msra.mxu0 0.0
    %143 = vmatpush.msra.mxu0 0.0
    %144 = vmatpush.msra.mxu0 %v100
    %145 = vmatpush.msra.mxu0 %v50
    %146 = vmatpush.msra.mxu0 %v98
    %147 = vmatmul.f32.gmra.mxu0 %v109
    %v148 = vpop.f32.mrf.mxu0
    %v149 = vadd.f32 %v105, %v148
    %150 = vdwg.mxu0
    %v151 = vmax.f32 %v129, 0.0
    %v152 = vmax.f32 %v149, 0.0
    %v153 = vld [vmem:[#allocation5] sm:$0xff]
    %154 = vrot.lane.b32.xlu0 %v151, 1
    %v155 = vpop.permute.xlu0 %154
    %156 = vrot.lane.b32.xlu0 %v152, 1
    %v157 = vpop.permute.xlu0 %156
    %v158 = vsel %vm87, %v155, %v157
    %v159 = vsel %vm87, %v157, %v155
    %160 = vrot.lane.b32.xlu0 %v151, 127
    %v161 = vpop.permute.xlu0 %160
    %162 = vrot.lane.b32.xlu0 %v152, 127
    %v163 = vpop.permute.xlu0 %162
    %v164 = vsel %vm94, %v161, %v163
    %v165 = vsel %vm94, %v163, %v161
    %v166 = vsel %vm78, %v159, 0.0
    %v167 = vsel %vm79, %v158, 0.0
    %v168 = vsel %vm80, %v164, 0.0
    %v169 = vsel %vm81, %v165, 0.0
    %v170 = vld [vmem:[%s4] sm:$0xff]
    %172 = vset.pattern.permute.xlu0 0
    %173 = vperm.xlu0 %172, %v170
    %v174 = vpop.permute.xlu0 %173
    %v177 = vsel %vm107, %v153, 0
    %179 = vmatpush.msra.mxu0 0.0
    %180 = vmatpush.msra.mxu0 0.0
    %181 = vmatpush.msra.mxu0 0.0
    %182 = vmatpush.msra.mxu0 0.0
    %183 = vmatpush.msra.mxu0 0.0
    %184 = vmatpush.msra.mxu0 0.0
    %185 = vmatpush.msra.mxu0 0.0
    %186 = vmatpush.msra.mxu0 0.0
    %187 = vmatpush.msra.mxu0 0.0
    %188 = vmatpush.msra.mxu0 0.0
    %189 = vmatpush.msra.mxu0 0.0
    %190 = vmatpush.msra.mxu0 0.0
    %191 = vmatpush.msra.mxu0 0.0
    %192 = vmatpush.msra.mxu0 %v168
    %193 = vmatpush.msra.mxu0 %v151
    %194 = vmatpush.msra.mxu0 %v166
    %195 = vmatmul.f32.gmra.mxu0 %v177
    %v196 = vpop.f32.mrf.mxu0
    %v197 = vadd.f32 %v174, %v196
    %198 = vdwg.mxu0
    %199 = vmatpush.msra.mxu0 0.0
    %200 = vmatpush.msra.mxu0 0.0
    %201 = vmatpush.msra.mxu0 0.0
    %202 = vmatpush.msra.mxu0 0.0
    %203 = vmatpush.msra.mxu0 0.0
    %204 = vmatpush.msra.mxu0 0.0
    %205 = vmatpush.msra.mxu0 0.0
    %206 = vmatpush.msra.mxu0 0.0
    %207 = vmatpush.msra.mxu0 0.0
    %208 = vmatpush.msra.mxu0 0.0
    %209 = vmatpush.msra.mxu0 0.0
    %210 = vmatpush.msra.mxu0 0.0
    %211 = vmatpush.msra.mxu0 0.0
    %212 = vmatpush.msra.mxu0 %v169
    %213 = vmatpush.msra.mxu0 %v152
    %214 = vmatpush.msra.mxu0 %v167
    %215 = vmatmul.f32.gmra.mxu0 %v177
    %v216 = vpop.f32.mrf.mxu0
    %v217 = vadd.f32 %v174, %v216
    %218 = vdwg.mxu0
    %v219 = vadd.f32 %v197, %v49
    %v220 = vadd.f32 %v217, %v50
    %v221 = vmax.f32 %v219, 0.0
    %v222 = vmax.f32 %v220, 0.0
    %223 = vst [vmem:[#allocation7] sm:$0xff] %v221
    %224 = vst [vmem:[#allocation7 + $0x8] sm:$0xff] %v222
    // Predicated region
    $region30: #{tpu_custom_call.1} parent=1 // pred_check
      _
    $region31: #{tpu_custom_call.1} parent=1 // pred_check_branch
      %226 = sbr.rel (0) target = $region33
    $region32: #{tpu_custom_call.1} parent=1 // pred_region
      %228 = vsyncadd [#allocation4], 0
      %s230 = sshll.u32 [#allocation7], 4
      %s231 = int_to_ptr.vmem [resolvable:$true] %s230
      %s232 = sshll.u32 %s5, 4
      %s233 = int_to_ptr.hbm [resolvable:$true] %s232
      %235 = dma.vmem_to_hbm [thread:$0]  %s231, 256, %s233, [#allocation4]
    $region33: #{tpu_custom_call.1} parent=1 // pred_fallthru
      _
    // Predicated region
    $region34: #{tpu_custom_call.1} parent=1 // pred_check
      _
    $region35: #{tpu_custom_call.1} parent=1 // pred_check_branch
      %237 = sbr.rel (0) target = $region37
    $region36: #{tpu_custom_call.1} parent=1 // pred_region
      %239 = dma.done [#allocation4], 256
    $region37: #{tpu_custom_call.1} parent=1 // pred_fallthru
      _
    %240 = vsyncpa [#allocation3], 1
    %241 = vsyncpa [#allocation6], 1
    %242 = vsyncpa [#allocation4], 1

</llo_original>
